<compile_context>
chip_gen: v7x
topology: tpu7x:2x2x1
jax: 0.10.0
libtpu: 0.0.40
codegen_flags: <defaults>
</compile_context>

<pallas_src>
import jax
import jax.numpy as jnp
from jax.experimental import pallas as pl
from jax.experimental.pallas import tpu as pltpu


def _round_up(a, b):
    return (a + b - 1) // b * b


def mlp_kernel(x_ref, w1_ref, b1_ref, w2_ref, b2_ref, w3_ref, b3_ref,
               w4_ref, b4_ref, o_ref):
    f32 = jnp.float32
    in_dim = x_ref.shape[0]

    # Layer 1: K = input_dim (tiny) -> VPU broadcast-FMAs instead of an MXU
    # matmul.  Operands are read straight from VMEM; accumulate in f32.
    pre = w1_ref[:, 0:1].astype(f32) * x_ref[0:1, :].astype(f32)
    for k in range(1, in_dim):
        pre = pre + w1_ref[:, k:k + 1].astype(f32) * x_ref[k:k + 1, :].astype(f32)
    h = jnp.tanh(pre + b1_ref[...].astype(f32))

    # Layers 2 & 3: hidden x hidden on the MXU, f32 accumulation, tanh in f32
    # (activations are cast to the weight dtype only as MXU operands).
    h = jnp.tanh(jnp.dot(w2_ref[...], h.astype(w2_ref.dtype),
                         preferred_element_type=f32) + b2_ref[...].astype(f32))
    h = jnp.tanh(jnp.dot(w3_ref[...], h.astype(w3_ref.dtype),
                         preferred_element_type=f32) + b3_ref[...].astype(f32))

    # Layer 4: only output_dim rows, but the MXU has plenty of slack here and
    # this avoids sublane-extracting a computed activation value on the VPU.
    y = jnp.dot(w4_ref[...], h.astype(w4_ref.dtype),
                preferred_element_type=f32) + b4_ref[...].astype(f32)
    o_ref[...] = y.astype(o_ref.dtype)


def multilayer_net_forward_fm(x_fm, params, *, tn_max=1024):
    """Feature-major forward.

    x_fm:   [input_dim, N] (N on the lane axis), f32 or bf16.
    params: w1..w4 as [out, in] (PyTorch orientation), b1..b4 as [out, 1] f32.
    Returns [output_dim, N] float32.
    """
    d_in, n = x_fm.shape
    h_dim = params["w1"].shape[0]
    d_out = params["w4"].shape[0]

    # Lane tile: multiple of 128, capped at tn_max; keep >= 2 grid steps when
    # the batch allows it so v7x's two TensorCores both get work.
    tile = min(tn_max, _round_up(n, 128))
    if n > 128 and _round_up(n, tile) // tile < 2:
        tile = _round_up(_round_up(n, 256) // 2, 128)
    n_pad = _round_up(n, tile)
    if n_pad != n:
        x_fm = jnp.pad(x_fm, ((0, 0), (0, n_pad - n)))

    # Weight/bias blocks cover the full (tiny) arrays; their index_map is
    # constant so they stay resident in VMEM across grid steps.
    full = lambda shape: pl.BlockSpec(shape, lambda i: (0, 0))

    out = pl.pallas_call(
        mlp_kernel,
        out_shape=jax.ShapeDtypeStruct((d_out, n_pad), jnp.float32),
        grid_spec=pltpu.PrefetchScalarGridSpec(
            num_scalar_prefetch=0,
            grid=(n_pad // tile,),
            in_specs=[
                pl.BlockSpec((d_in, tile), lambda i: (0, i)),   # x tile (lane-dense)
                full((h_dim, d_in)),                            # w1
                full((h_dim, 1)),                               # b1
                full((h_dim, h_dim)),                           # w2
                full((h_dim, 1)),                               # b2
                full((h_dim, h_dim)),                           # w3
                full((h_dim, 1)),                               # b3
                full((d_out, h_dim)),                           # w4
                full((d_out, 1)),                               # b4
            ],
            out_specs=pl.BlockSpec((d_out, tile), lambda i: (0, i)),
        ),
        compiler_params=pltpu.CompilerParams(
            dimension_semantics=("parallel",)),
    )(x_fm, params["w1"], params["b1"], params["w2"], params["b2"],
      params["w3"], params["b3"], params["w4"], params["b4"])
    return out[:, :n]


def multilayer_net_forward(x, params, *, tn_max=1024):
    """PyTorch-convention forward: x is [N, input_dim], returns [N, output_dim]."""
    return multilayer_net_forward_fm(x.T, params, tn_max=tn_max).T


def init_params(key, input_dim, hidden_dim, output_dim, weight_dtype=jnp.float32):
    """nn.Linear-style init: U(-1/sqrt(fan_in), +), weights stored [out, in]."""
    dims = [(hidden_dim, input_dim),
            (hidden_dim, hidden_dim),
            (hidden_dim, hidden_dim),
            (output_dim, hidden_dim)]
    params = {}
    for idx, (fan_out, fan_in) in enumerate(dims, start=1):
        key, kw, kb = jax.random.split(key, 3)
        bound = 1.0 / (fan_in ** 0.5)
        params[f"w{idx}"] = jax.random.uniform(
            kw, (fan_out, fan_in), jnp.float32, -bound, bound).astype(weight_dtype)
        # Biases stay f32 (negligible size; keeps the f32 bias-add path exact).
        params[f"b{idx}"] = jax.random.uniform(
            kb, (fan_out, 1), jnp.float32, -bound, bound)
    return params


def reference_forward(x, p):
    """Pure-JAX reference matching the PyTorch module (batch-major)."""
    w = {k: v.astype(jnp.float32) for k, v in p.items()}
    h = jnp.tanh(x @ w["w1"].T + w["b1"][:, 0])
    h = jnp.tanh(h @ w["w2"].T + w["b2"][:, 0])
    h = jnp.tanh(h @ w["w3"].T + w["b3"][:, 0])
    return h @ w["w4"].T + w["b4"][:, 0]


if __name__ == "__main__":
    # 3D Deep Energy Method net: 3 input coords -> hidden -> 3 displacements.
    input_dim, hidden_dim, output_dim = 3, 32, 3
    n = 384  # arbitrary (non-power-of-two) collocation-point count

    key = jax.random.PRNGKey(0)
    key, kx = jax.random.split(key)
    params = init_params(key, input_dim, hidden_dim, output_dim)
    x = jax.random.normal(kx, (n, input_dim), jnp.float32)

    # f32 path (exact check against the reference).
    out = jax.block_until_ready(multilayer_net_forward(x, params))
    ref = reference_forward(x, params)
    assert out.shape == (n, output_dim)
    assert jnp.allclose(out, ref, atol=2e-5, rtol=2e-5)

    # bf16 weights/inputs (halves HBM traffic on v6e/v7x); accumulation,
    # bias-add and tanh stay in f32 inside the kernel.
    params_bf16 = {k: (v.astype(jnp.bfloat16) if k.startswith("w") else v)
                   for k, v in params.items()}
    out_bf16 = jax.block_until_ready(
        multilayer_net_forward(x.astype(jnp.bfloat16), params_bf16))
    assert out_bf16.dtype == jnp.float32
    assert float(jnp.max(jnp.abs(out_bf16 - ref))) < 0.25

    print("KERNEL_OK")
</pallas_src>

<mosaic_0001>
module attributes {stable_mosaic.version = 11 : i64} {
  func.func @mlp_kernel(%arg0: i32, %arg1: memref<3x256xf32, #tpu.memory_space<vmem>>, %arg2: memref<32x3xf32, #tpu.memory_space<vmem>>, %arg3: memref<32x1xf32, #tpu.memory_space<vmem>>, %arg4: memref<32x32xf32, #tpu.memory_space<vmem>>, %arg5: memref<32x1xf32, #tpu.memory_space<vmem>>, %arg6: memref<32x32xf32, #tpu.memory_space<vmem>>, %arg7: memref<32x1xf32, #tpu.memory_space<vmem>>, %arg8: memref<3x32xf32, #tpu.memory_space<vmem>>, %arg9: memref<3x1xf32, #tpu.memory_space<vmem>>, %arg10: memref<3x256xf32, #tpu.memory_space<vmem>>) attributes {dimension_semantics = [#tpu.dimension_semantics<parallel>], iteration_bounds = array<i64: 2>, scalar_prefetch = 0 : i64, scratch_operands = 0 : i64, tpu.core_type = #tpu.core_type<tc>, window_params = [{transform_indices = @transform_0, window_bounds = array<i64: 3, 256>}, {pipeline_mode = #tpu.pipeline_mode<synchronous>, transform_indices = @transform_1, window_bounds = array<i64: 32, 3>}, {pipeline_mode = #tpu.pipeline_mode<synchronous>, transform_indices = @transform_2, window_bounds = array<i64: 32, 1>}, {pipeline_mode = #tpu.pipeline_mode<synchronous>, transform_indices = @transform_3, window_bounds = array<i64: 32, 32>}, {pipeline_mode = #tpu.pipeline_mode<synchronous>, transform_indices = @transform_4, window_bounds = array<i64: 32, 1>}, {pipeline_mode = #tpu.pipeline_mode<synchronous>, transform_indices = @transform_5, window_bounds = array<i64: 32, 32>}, {pipeline_mode = #tpu.pipeline_mode<synchronous>, transform_indices = @transform_6, window_bounds = array<i64: 32, 1>}, {pipeline_mode = #tpu.pipeline_mode<synchronous>, transform_indices = @transform_7, window_bounds = array<i64: 3, 32>}, {pipeline_mode = #tpu.pipeline_mode<synchronous>, transform_indices = @transform_8, window_bounds = array<i64: 3, 1>}, {transform_indices = @transform_9, window_bounds = array<i64: 3, 256>}]} {
    %c0 = arith.constant 0 : index
    %c0_0 = arith.constant 0 : index
    %0 = vector.load %arg2[%c0, %c0_0] : memref<32x3xf32, #tpu.memory_space<vmem>>, vector<32x1xf32>
    %c0_1 = arith.constant 0 : index
    %c0_2 = arith.constant 0 : index
    %1 = vector.load %arg1[%c0_1, %c0_2] : memref<3x256xf32, #tpu.memory_space<vmem>>, vector<1x256xf32>
    %2 = vector.broadcast %0 : vector<32x1xf32> to vector<32x256xf32>
    %3 = vector.broadcast %1 : vector<1x256xf32> to vector<32x256xf32>
    %4 = arith.mulf %2, %3 : vector<32x256xf32>
    %c0_3 = arith.constant 0 : index
    %c1 = arith.constant 1 : index
    %5 = vector.load %arg2[%c0_3, %c1] : memref<32x3xf32, #tpu.memory_space<vmem>>, vector<32x1xf32>
    %c1_4 = arith.constant 1 : index
    %c0_5 = arith.constant 0 : index
    %6 = vector.load %arg1[%c1_4, %c0_5] : memref<3x256xf32, #tpu.memory_space<vmem>>, vector<1x256xf32>
    %7 = vector.broadcast %5 : vector<32x1xf32> to vector<32x256xf32>
    %8 = vector.broadcast %6 : vector<1x256xf32> to vector<32x256xf32>
    %9 = arith.mulf %7, %8 : vector<32x256xf32>
    %10 = arith.addf %4, %9 : vector<32x256xf32>
    %c0_6 = arith.constant 0 : index
    %c2 = arith.constant 2 : index
    %11 = vector.load %arg2[%c0_6, %c2] : memref<32x3xf32, #tpu.memory_space<vmem>>, vector<32x1xf32>
    %c2_7 = arith.constant 2 : index
    %c0_8 = arith.constant 0 : index
    %12 = vector.load %arg1[%c2_7, %c0_8] : memref<3x256xf32, #tpu.memory_space<vmem>>, vector<1x256xf32>
    %13 = vector.broadcast %11 : vector<32x1xf32> to vector<32x256xf32>
    %14 = vector.broadcast %12 : vector<1x256xf32> to vector<32x256xf32>
    %15 = arith.mulf %13, %14 : vector<32x256xf32>
    %16 = arith.addf %10, %15 : vector<32x256xf32>
    %c0_9 = arith.constant 0 : index
    %c0_10 = arith.constant 0 : index
    %17 = vector.load %arg3[%c0_9, %c0_10] : memref<32x1xf32, #tpu.memory_space<vmem>>, vector<32x1xf32>
    %18 = vector.broadcast %17 : vector<32x1xf32> to vector<32x256xf32>
    %19 = arith.addf %16, %18 : vector<32x256xf32>
    %20 = math.tanh %19 : vector<32x256xf32>
    %c0_11 = arith.constant 0 : index
    %c0_12 = arith.constant 0 : index
    %21 = vector.load %arg4[%c0_11, %c0_12] : memref<32x32xf32, #tpu.memory_space<vmem>>, vector<32x32xf32>
    %cst = arith.constant dense<0.000000e+00> : vector<32x256xf32>
    %22 = tpu.matmul %21, %20, %cst {dimension_numbers = #tpu.dot_dimension_numbers<[1], [0], [0], [1], [0, 0, 1, 1], [], []>} : vector<32x32xf32>, vector<32x256xf32>, vector<32x256xf32> -> vector<32x256xf32>
    %c0_13 = arith.constant 0 : index
    %c0_14 = arith.constant 0 : index
    %23 = vector.load %arg5[%c0_13, %c0_14] : memref<32x1xf32, #tpu.memory_space<vmem>>, vector<32x1xf32>
    %24 = vector.broadcast %23 : vector<32x1xf32> to vector<32x256xf32>
    %25 = arith.addf %22, %24 : vector<32x256xf32>
    %26 = math.tanh %25 : vector<32x256xf32>
    %c0_15 = arith.constant 0 : index
    %c0_16 = arith.constant 0 : index
    %27 = vector.load %arg6[%c0_15, %c0_16] : memref<32x32xf32, #tpu.memory_space<vmem>>, vector<32x32xf32>
    %cst_17 = arith.constant dense<0.000000e+00> : vector<32x256xf32>
    %28 = tpu.matmul %27, %26, %cst_17 {dimension_numbers = #tpu.dot_dimension_numbers<[1], [0], [0], [1], [0, 0, 1, 1], [], []>} : vector<32x32xf32>, vector<32x256xf32>, vector<32x256xf32> -> vector<32x256xf32>
    %c0_18 = arith.constant 0 : index
    %c0_19 = arith.constant 0 : index
    %29 = vector.load %arg7[%c0_18, %c0_19] : memref<32x1xf32, #tpu.memory_space<vmem>>, vector<32x1xf32>
    %30 = vector.broadcast %29 : vector<32x1xf32> to vector<32x256xf32>
    %31 = arith.addf %28, %30 : vector<32x256xf32>
    %32 = math.tanh %31 : vector<32x256xf32>
    %c0_20 = arith.constant 0 : index
    %c0_21 = arith.constant 0 : index
    %33 = vector.load %arg8[%c0_20, %c0_21] : memref<3x32xf32, #tpu.memory_space<vmem>>, vector<3x32xf32>
    %cst_22 = arith.constant dense<0.000000e+00> : vector<3x256xf32>
    %34 = tpu.matmul %33, %32, %cst_22 {dimension_numbers = #tpu.dot_dimension_numbers<[1], [0], [0], [1], [0, 0, 1, 1], [], []>} : vector<3x32xf32>, vector<32x256xf32>, vector<3x256xf32> -> vector<3x256xf32>
    %c0_23 = arith.constant 0 : index
    %c0_24 = arith.constant 0 : index
    %35 = vector.load %arg9[%c0_23, %c0_24] : memref<3x1xf32, #tpu.memory_space<vmem>>, vector<3x1xf32>
    %36 = vector.broadcast %35 : vector<3x1xf32> to vector<3x256xf32>
    %37 = arith.addf %34, %36 : vector<3x256xf32>
    %c0_25 = arith.constant 0 : index
    %c0_26 = arith.constant 0 : index
    %38 = vector.load %arg10[%c0_25, %c0_26] : memref<3x256xf32, #tpu.memory_space<vmem>>, vector<3x256xf32>
    tpu.vector_store %arg10[%c0_25, %c0_26], %37 {strides = array<i32>} : memref<3x256xf32, #tpu.memory_space<vmem>>, vector<3x256xf32>,
    return
  }
  func.func @transform_0(%arg0: i32) -> (i32, i32) {
    %c0_i32 = arith.constant 0 : i32
    %c0_i32_0 = arith.constant 0 : i32
    return %c0_i32, %arg0 : i32, i32
  }
  func.func @transform_1(%arg0: i32) -> (i32, i32) {
    %c0_i32 = arith.constant 0 : i32
    %c0_i32_0 = arith.constant 0 : i32
    %c0_i32_1 = arith.constant 0 : i32
    return %c0_i32, %c0_i32_0 : i32, i32
  }
  func.func @transform_2(%arg0: i32) -> (i32, i32) {
    %c0_i32 = arith.constant 0 : i32
    %c0_i32_0 = arith.constant 0 : i32
    %c0_i32_1 = arith.constant 0 : i32
    return %c0_i32, %c0_i32_0 : i32, i32
  }
  func.func @transform_3(%arg0: i32) -> (i32, i32) {
    %c0_i32 = arith.constant 0 : i32
    %c0_i32_0 = arith.constant 0 : i32
    %c0_i32_1 = arith.constant 0 : i32
    return %c0_i32, %c0_i32_0 : i32, i32
  }
  func.func @transform_4(%arg0: i32) -> (i32, i32) {
    %c0_i32 = arith.constant 0 : i32
    %c0_i32_0 = arith.constant 0 : i32
    %c0_i32_1 = arith.constant 0 : i32
    return %c0_i32, %c0_i32_0 : i32, i32
  }
  func.func @transform_5(%arg0: i32) -> (i32, i32) {
    %c0_i32 = arith.constant 0 : i32
    %c0_i32_0 = arith.constant 0 : i32
    %c0_i32_1 = arith.constant 0 : i32
    return %c0_i32, %c0_i32_0 : i32, i32
  }
  func.func @transform_6(%arg0: i32) -> (i32, i32) {
    %c0_i32 = arith.constant 0 : i32
    %c0_i32_0 = arith.constant 0 : i32
    %c0_i32_1 = arith.constant 0 : i32
    return %c0_i32, %c0_i32_0 : i32, i32
  }
  func.func @transform_7(%arg0: i32) -> (i32, i32) {
    %c0_i32 = arith.constant 0 : i32
    %c0_i32_0 = arith.constant 0 : i32
    %c0_i32_1 = arith.constant 0 : i32
    return %c0_i32, %c0_i32_0 : i32, i32
  }
  func.func @transform_8(%arg0: i32) -> (i32, i32) {
    %c0_i32 = arith.constant 0 : i32
    %c0_i32_0 = arith.constant 0 : i32
    %c0_i32_1 = arith.constant 0 : i32
    return %c0_i32, %c0_i32_0 : i32, i32
  }
  func.func @transform_9(%arg0: i32) -> (i32, i32) {
    %c0_i32 = arith.constant 0 : i32
    %c0_i32_0 = arith.constant 0 : i32
    return %c0_i32, %arg0 : i32, i32
  }
}

</mosaic_0001>

<llo_original>
// kernel: tpu_custom_call.1
$region0: #{tpu_custom_call.1}
  #allocation0 [shape = 'u32[]', space=smem, size = 0x4, offset = 0x4, fixed_abs, tag = 'smem constant byte address 0x4 - core index']
  #allocation1 [shape = 'u32[144,128]{1,0:T(1,128)}', space=vmem, size = 0x12000, scoped, tag = 'internal scratch']
  %s0 = inlined_call_operand.vmem [shape: f32[3,512], index: 0, kind: input, shape index: {}]
  %s1 = inlined_call_operand.vmem [shape: f32[32,3], index: 1, kind: input, shape index: {}]
  %s2 = inlined_call_operand.vmem [shape: f32[32,1], index: 2, kind: input, shape index: {}]
  %s3 = inlined_call_operand.vmem [shape: f32[32,32], index: 3, kind: input, shape index: {}]
  %s4 = inlined_call_operand.vmem [shape: f32[32,1], index: 4, kind: input, shape index: {}]
  %s5 = inlined_call_operand.vmem [shape: f32[32,32], index: 5, kind: input, shape index: {}]
  %s6 = inlined_call_operand.vmem [shape: f32[32,1], index: 6, kind: input, shape index: {}]
  %s7 = inlined_call_operand.vmem [shape: f32[3,32], index: 7, kind: input, shape index: {}]
  %s8 = inlined_call_operand.vmem [shape: f32[3,1], index: 8, kind: input, shape index: {}]
  %s9 = inlined_call_operand.hbm [shape: f32[3,512], index: 9, kind: output, shape index: {}]
  %s10 = sld [smem:[#allocation0]]
  $region69: #{tpu_custom_call.1} parent=0
    _
  %s12 = ssub.s32 1, %s10
  %s13 = scalar_select 0, %s12, %s10
  $region1: #{tpu_custom_call.1} parent=0
    #allocation2 [shape = 'u8[8192]{0}', space=vmem, size = 0x2000, scoped, tag = 'output window, operand 0']
    #allocation3 [shape = 's32[2]{0}', space=sflag, size = 0x8, scoped, tag = 'scoped memory for tpu_custom_call.1']
    %14 = vsyncpa [#allocation3], 0
    %s15 = scalar_lea.sflag [#allocation3], 1
    %16 = vsyncpa %s15, 0
    loop: start=0, step=1, limit=4
    $region2: #{tpu_custom_call.1} parent=1 // loop_pre_header
      _
    $region3: #{tpu_custom_call.1} parent=1 // loop_header
      %s18 = sphi 0, %s22
      %p19 = scmp.ge.s32.totalorder %s18, 4
      %s28 = sphi 0, %s30
      %s31 = sphi 0, %s28
      %s32 = sphi 0, %s31
      %s48 = sphi 0, %s32
      %s52 = sphi 0, %s52
      %s54 = sphi 0, %s52
      %s55 = sphi 0, %s54
      %s69 = sphi 0, %s55
      %s73 = sphi 0, %s73
      %s75 = sphi 0, %s73
      %s76 = sphi 0, %s75
      %s90 = sphi 0, %s76
      %s94 = sphi 0, %s94
      %s96 = sphi 0, %s94
      %s97 = sphi 0, %s96
      %s111 = sphi 0, %s97
      %s115 = sphi 0, %s115
      %s117 = sphi 0, %s115
      %s118 = sphi 0, %s117
      %s132 = sphi 0, %s118
      %s136 = sphi 0, %s136
      %s138 = sphi 0, %s136
      %s139 = sphi 0, %s138
      %s153 = sphi 0, %s139
      %s157 = sphi 0, %s157
      %s159 = sphi 0, %s157
      %s160 = sphi 0, %s159
      %s174 = sphi 0, %s160
      %s178 = sphi 0, %s178
      %s180 = sphi 0, %s178
      %s181 = sphi 0, %s180
      %s195 = sphi 0, %s181
      %s199 = sphi 0, %s199
      %s201 = sphi 0, %s199
      %s202 = sphi 0, %s201
      %s216 = sphi 0, %s202
      %s222 = sphi 0, %s224
      %s225 = sphi 0, %s222
      %s226 = sphi 0, %s225
      %s242 = sphi 0, %s226
    $region4: #{tpu_custom_call.1} parent=1 // loop_header_branch
      %21 = sbr.rel (%p19) target = $region8
    $region5: #{tpu_custom_call.1} parent=1 // loop_body
      %s23 = ssub.s32 %s18, 1
      %s24 = ssub.s32 %s18, 2
      %s25 = sadd.s32 %s18, 1
      %s26 = ssub.s32 %s18, %s25
      %p27 = scmp.eq.s32.totalorder %s26, 0
      %s29 = sadd.s32 %s28, 1
      %s30 = scalar_select %p27, %s28, %s29
      %p33 = pneg %p27
      %p34 = scmp.eq.s32.totalorder %s18, 1
      %p35 = por %p33, %p34
      %p36 = scmp.ne.s32.totalorder %s28, %s31
      %p37 = scmp.eq.s32.totalorder %s18, 0
      %p38 = por %p36, %p37
      %p39 = scmp.ne.s32.totalorder %s28, %s31
      %p40 = scmp.eq.s32.totalorder %s23, 1
      %p41 = por %p39, %p40
      %p42 = scmp.ne.s32.totalorder %s31, %s32
      %p43 = scmp.eq.s32.totalorder %s23, 0
      %p44 = por %p42, %p43
      %p45 = scmp.ne.s32.totalorder %s31, %s32
      %p46 = scmp.eq.s32.totalorder %s24, 1
      %p47 = por %p45, %p46
      %p49 = scmp.ne.s32.totalorder %s32, %s48
      %p50 = scmp.eq.s32.totalorder %s24, 0
      %p51 = por %p49, %p50
      %s53 = sadd.s32 %s52, 1
      %p56 = scmp.eq.s32.totalorder %s18, 1
      %p57 = scmp.ne.s32.totalorder %s52, %s54
      %p58 = scmp.eq.s32.totalorder %s18, 0
      %p59 = por %p57, %p58
      %p60 = scmp.ne.s32.totalorder %s52, %s54
      %p61 = scmp.eq.s32.totalorder %s23, 1
      %p62 = por %p60, %p61
      %p63 = scmp.ne.s32.totalorder %s54, %s55
      %p64 = scmp.eq.s32.totalorder %s23, 0
      %p65 = por %p63, %p64
      %p66 = scmp.ne.s32.totalorder %s54, %s55
      %p67 = scmp.eq.s32.totalorder %s24, 1
      %p68 = por %p66, %p67
      %p70 = scmp.ne.s32.totalorder %s55, %s69
      %p71 = scmp.eq.s32.totalorder %s24, 0
      %p72 = por %p70, %p71
      %s74 = sadd.s32 %s73, 1
      %p77 = scmp.eq.s32.totalorder %s18, 1
      %p78 = scmp.ne.s32.totalorder %s73, %s75
      %p79 = scmp.eq.s32.totalorder %s18, 0
      %p80 = por %p78, %p79
      %p81 = scmp.ne.s32.totalorder %s73, %s75
      %p82 = scmp.eq.s32.totalorder %s23, 1
      %p83 = por %p81, %p82
      %p84 = scmp.ne.s32.totalorder %s75, %s76
      %p85 = scmp.eq.s32.totalorder %s23, 0
      %p86 = por %p84, %p85
      %p87 = scmp.ne.s32.totalorder %s75, %s76
      %p88 = scmp.eq.s32.totalorder %s24, 1
      %p89 = por %p87, %p88
      %p91 = scmp.ne.s32.totalorder %s76, %s90
      %p92 = scmp.eq.s32.totalorder %s24, 0
      %p93 = por %p91, %p92
      %s95 = sadd.s32 %s94, 1
      %p98 = scmp.eq.s32.totalorder %s18, 1
      %p99 = scmp.ne.s32.totalorder %s94, %s96
      %p100 = scmp.eq.s32.totalorder %s18, 0
      %p101 = por %p99, %p100
      %p102 = scmp.ne.s32.totalorder %s94, %s96
      %p103 = scmp.eq.s32.totalorder %s23, 1
      %p104 = por %p102, %p103
      %p105 = scmp.ne.s32.totalorder %s96, %s97
      %p106 = scmp.eq.s32.totalorder %s23, 0
      %p107 = por %p105, %p106
      %p108 = scmp.ne.s32.totalorder %s96, %s97
      %p109 = scmp.eq.s32.totalorder %s24, 1
      %p110 = por %p108, %p109
      %p112 = scmp.ne.s32.totalorder %s97, %s111
      %p113 = scmp.eq.s32.totalorder %s24, 0
      %p114 = por %p112, %p113
      %s116 = sadd.s32 %s115, 1
      %p119 = scmp.eq.s32.totalorder %s18, 1
      %p120 = scmp.ne.s32.totalorder %s115, %s117
      %p121 = scmp.eq.s32.totalorder %s18, 0
      %p122 = por %p120, %p121
      %p123 = scmp.ne.s32.totalorder %s115, %s117
      %p124 = scmp.eq.s32.totalorder %s23, 1
      %p125 = por %p123, %p124
      %p126 = scmp.ne.s32.totalorder %s117, %s118
      %p127 = scmp.eq.s32.totalorder %s23, 0
      %p128 = por %p126, %p127
      %p129 = scmp.ne.s32.totalorder %s117, %s118
      %p130 = scmp.eq.s32.totalorder %s24, 1
      %p131 = por %p129, %p130
      %p133 = scmp.ne.s32.totalorder %s118, %s132
      %p134 = scmp.eq.s32.totalorder %s24, 0
      %p135 = por %p133, %p134
      %s137 = sadd.s32 %s136, 1
      %p140 = scmp.eq.s32.totalorder %s18, 1
      %p141 = scmp.ne.s32.totalorder %s136, %s138
      %p142 = scmp.eq.s32.totalorder %s18, 0
      %p143 = por %p141, %p142
      %p144 = scmp.ne.s32.totalorder %s136, %s138
      %p145 = scmp.eq.s32.totalorder %s23, 1
      %p146 = por %p144, %p145
      %p147 = scmp.ne.s32.totalorder %s138, %s139
      %p148 = scmp.eq.s32.totalorder %s23, 0
      %p149 = por %p147, %p148
      %p150 = scmp.ne.s32.totalorder %s138, %s139
      %p151 = scmp.eq.s32.totalorder %s24, 1
      %p152 = por %p150, %p151
      %p154 = scmp.ne.s32.totalorder %s139, %s153
      %p155 = scmp.eq.s32.totalorder %s24, 0
      %p156 = por %p154, %p155
      %s158 = sadd.s32 %s157, 1
      %p161 = scmp.eq.s32.totalorder %s18, 1
      %p162 = scmp.ne.s32.totalorder %s157, %s159
      %p163 = scmp.eq.s32.totalorder %s18, 0
      %p164 = por %p162, %p163
      %p165 = scmp.ne.s32.totalorder %s157, %s159
      %p166 = scmp.eq.s32.totalorder %s23, 1
      %p167 = por %p165, %p166
      %p168 = scmp.ne.s32.totalorder %s159, %s160
      %p169 = scmp.eq.s32.totalorder %s23, 0
      %p170 = por %p168, %p169
      %p171 = scmp.ne.s32.totalorder %s159, %s160
      %p172 = scmp.eq.s32.totalorder %s24, 1
      %p173 = por %p171, %p172
      %p175 = scmp.ne.s32.totalorder %s160, %s174
      %p176 = scmp.eq.s32.totalorder %s24, 0
      %p177 = por %p175, %p176
      %s179 = sadd.s32 %s178, 1
      %p182 = scmp.eq.s32.totalorder %s18, 1
      %p183 = scmp.ne.s32.totalorder %s178, %s180
      %p184 = scmp.eq.s32.totalorder %s18, 0
      %p185 = por %p183, %p184
      %p186 = scmp.ne.s32.totalorder %s178, %s180
      %p187 = scmp.eq.s32.totalorder %s23, 1
      %p188 = por %p186, %p187
      %p189 = scmp.ne.s32.totalorder %s180, %s181
      %p190 = scmp.eq.s32.totalorder %s23, 0
      %p191 = por %p189, %p190
      %p192 = scmp.ne.s32.totalorder %s180, %s181
      %p193 = scmp.eq.s32.totalorder %s24, 1
      %p194 = por %p192, %p193
      %p196 = scmp.ne.s32.totalorder %s181, %s195
      %p197 = scmp.eq.s32.totalorder %s24, 0
      %p198 = por %p196, %p197
      %s200 = sadd.s32 %s199, 1
      %p203 = scmp.eq.s32.totalorder %s18, 1
      %p204 = scmp.ne.s32.totalorder %s199, %s201
      %p205 = scmp.eq.s32.totalorder %s18, 0
      %p206 = por %p204, %p205
      %p207 = scmp.ne.s32.totalorder %s199, %s201
      %p208 = scmp.eq.s32.totalorder %s23, 1
      %p209 = por %p207, %p208
      %p210 = scmp.ne.s32.totalorder %s201, %s202
      %p211 = scmp.eq.s32.totalorder %s23, 0
      %p212 = por %p210, %p211
      %p213 = scmp.ne.s32.totalorder %s201, %s202
      %p214 = scmp.eq.s32.totalorder %s24, 1
      %p215 = por %p213, %p214
      %p217 = scmp.ne.s32.totalorder %s202, %s216
      %p218 = scmp.eq.s32.totalorder %s24, 0
      %p219 = por %p217, %p218
      %s220 = ssub.s32 %s18, %s25
      %p221 = scmp.eq.s32.totalorder %s220, 0
      %s223 = sadd.s32 %s222, 1
      %s224 = scalar_select %p221, %s222, %s223
      %p227 = pneg %p221
      %p228 = scmp.eq.s32.totalorder %s18, 1
      %p229 = por %p227, %p228
      %p230 = scmp.ne.s32.totalorder %s222, %s225
      %p231 = scmp.eq.s32.totalorder %s18, 0
      %p232 = por %p230, %p231
      %p233 = scmp.ne.s32.totalorder %s222, %s225
      %p234 = scmp.eq.s32.totalorder %s23, 1
      %p235 = por %p233, %p234
      %p236 = scmp.ne.s32.totalorder %s225, %s226
      %p237 = scmp.eq.s32.totalorder %s23, 0
      %p238 = por %p236, %p237
      %p239 = scmp.ne.s32.totalorder %s225, %s226
      %p240 = scmp.eq.s32.totalorder %s24, 1
      %p241 = por %p239, %p240
      %p243 = scmp.ne.s32.totalorder %s226, %s242
      %p244 = scmp.eq.s32.totalorder %s24, 0
      %p245 = por %p243, %p244
      %p246 = scmp.le.s32.totalorder 1, %s18
      %p247 = scmp.lt.s32.totalorder %s18, 3
      %p248 = pnand %p246, %p247
      %p249 = pneg %p248
      // Predicated region
      $region9: #{tpu_custom_call.1} parent=5 // pred_check
        _
      $region10: #{tpu_custom_call.1} parent=5 // pred_check_branch
        %251 = sbr.rel (%p248) target = $region12
      $region11: #{tpu_custom_call.1} parent=5 // pred_region
        %s252 = ssub.s32 %s18, 1
        // Predicated region
        $region13: #{tpu_custom_call.1} parent=11 // pred_check
          %p253 = pneg %p65
        $region14: #{tpu_custom_call.1} parent=11 // pred_check_branch
          %255 = sbr.rel (%p253) target = $region16
        $region15: #{tpu_custom_call.1} parent=11 // pred_region
          _
        $region16: #{tpu_custom_call.1} parent=11 // pred_fallthru
          _
        // Predicated region
        $region17: #{tpu_custom_call.1} parent=11 // pred_check
          %p256 = pneg %p86
        $region18: #{tpu_custom_call.1} parent=11 // pred_check_branch
          %258 = sbr.rel (%p256) target = $region20
        $region19: #{tpu_custom_call.1} parent=11 // pred_region
          _
        $region20: #{tpu_custom_call.1} parent=11 // pred_fallthru
          _
        // Predicated region
        $region21: #{tpu_custom_call.1} parent=11 // pred_check
          %p259 = pneg %p107
        $region22: #{tpu_custom_call.1} parent=11 // pred_check_branch
          %261 = sbr.rel (%p259) target = $region24
        $region23: #{tpu_custom_call.1} parent=11 // pred_region
          _
        $region24: #{tpu_custom_call.1} parent=11 // pred_fallthru
          _
        // Predicated region
        $region25: #{tpu_custom_call.1} parent=11 // pred_check
          %p262 = pneg %p128
        $region26: #{tpu_custom_call.1} parent=11 // pred_check_branch
          %264 = sbr.rel (%p262) target = $region28
        $region27: #{tpu_custom_call.1} parent=11 // pred_region
          _
        $region28: #{tpu_custom_call.1} parent=11 // pred_fallthru
          _
        // Predicated region
        $region29: #{tpu_custom_call.1} parent=11 // pred_check
          %p265 = pneg %p149
        $region30: #{tpu_custom_call.1} parent=11 // pred_check_branch
          %267 = sbr.rel (%p265) target = $region32
        $region31: #{tpu_custom_call.1} parent=11 // pred_region
          _
        $region32: #{tpu_custom_call.1} parent=11 // pred_fallthru
          _
        // Predicated region
        $region33: #{tpu_custom_call.1} parent=11 // pred_check
          %p268 = pneg %p170
        $region34: #{tpu_custom_call.1} parent=11 // pred_check_branch
          %270 = sbr.rel (%p268) target = $region36
        $region35: #{tpu_custom_call.1} parent=11 // pred_region
          _
        $region36: #{tpu_custom_call.1} parent=11 // pred_fallthru
          _
        // Predicated region
        $region37: #{tpu_custom_call.1} parent=11 // pred_check
          %p271 = pneg %p191
        $region38: #{tpu_custom_call.1} parent=11 // pred_check_branch
          %273 = sbr.rel (%p271) target = $region40
        $region39: #{tpu_custom_call.1} parent=11 // pred_region
          _
        $region40: #{tpu_custom_call.1} parent=11 // pred_fallthru
          _
        // Predicated region
        $region41: #{tpu_custom_call.1} parent=11 // pred_check
          %p274 = pneg %p212
        $region42: #{tpu_custom_call.1} parent=11 // pred_check_branch
          %276 = sbr.rel (%p274) target = $region44
        $region43: #{tpu_custom_call.1} parent=11 // pred_region
          _
        $region44: #{tpu_custom_call.1} parent=11 // pred_fallthru
          _
      $region12: #{tpu_custom_call.1} parent=5 // pred_fallthru
        _
      %p277 = scmp.lt.s32.totalorder %s18, 2
      // Predicated region
      $region45: #{tpu_custom_call.1} parent=5 // pred_check
        %p278 = pneg %p277
      $region46: #{tpu_custom_call.1} parent=5 // pred_check_branch
        %280 = sbr.rel (%p278) target = $region48
      $region47: #{tpu_custom_call.1} parent=5 // pred_region
        // Predicated region
        $region49: #{tpu_custom_call.1} parent=47 // pred_check
          %p281 = pneg %p38
        $region50: #{tpu_custom_call.1} parent=47 // pred_check_branch
          %283 = sbr.rel (%p281) target = $region52
        $region51: #{tpu_custom_call.1} parent=47 // pred_region
          %s284 = smul.u32 2, %s18
          %p285 = scmp.lt.s32.totalorder %s284, 3
          %s286 = scalar_select %p285, %s284, 3
          %s287 = smul.addr %s286, 4
          %s288 = scalar_lea.vmem %s0, %s287
          %s289 = smul.u32 2, %s18
        $region52: #{tpu_custom_call.1} parent=47 // pred_fallthru
          _
      $region48: #{tpu_custom_call.1} parent=5 // pred_fallthru
        _
      %p290 = scmp.le.s32.totalorder 1, %s18
      %p291 = scmp.lt.s32.totalorder %s18, 3
      %p292 = pnand %p290, %p291
      %p293 = pneg %p292
      // Predicated region
      $region53: #{tpu_custom_call.1} parent=5 // pred_check
        _
      $region54: #{tpu_custom_call.1} parent=5 // pred_check_branch
        %295 = sbr.rel (%p292) target = $region56
      $region55: #{tpu_custom_call.1} parent=5 // pred_region
        %s296 = ssub.s32 %s18, 1
        %s297 = smul.u32 2, %s23
        %p298 = scmp.lt.s32.totalorder %s297, 3
        %s299 = scalar_select %p298, %s297, 3
        %s300 = smul.addr %s299, 4
        %s301 = scalar_lea.vmem %s0, %s300
        %p302 = pneg %p44
        %p303 = pneg %p41
        %p304 = pneg %p65
        %p305 = pneg %p62
        %p306 = pneg %p86
        %p307 = pneg %p83
        %p308 = pneg %p107
        %p309 = pneg %p104
        %p310 = pneg %p128
        %p311 = pneg %p125
        %p312 = pneg %p149
        %p313 = pneg %p146
        %p314 = pneg %p170
        %p315 = pneg %p167
        %p316 = pneg %p191
        %p317 = pneg %p188
        %p318 = pneg %p212
        %p319 = pneg %p209
        %p320 = pneg %p238
        %p321 = pneg %p235
        %s322 = sand.u32 %s225, 1
        %s323 = scalar_lea.sflag [#allocation3], %s322
        %s324 = sand.u32 %s225, 1
        %s325 = smul.addr %s324, 8
        %s326 = scalar_lea.vmem [#allocation2], %s325
        %s327 = smul.u32 2, %s23
        %p328 = scmp.lt.s32.totalorder %s327, 3
        %s329 = scalar_select %p328, %s327, 3
        %s330 = smul.addr %s329, 4
        %s331 = scalar_lea.vmem %s0, %s330
        %s332 = smul.u32 2, %s23
        %s333 = smul.u32 2, %s23
        %v334 = vld [vmem:[%s1] sm:$0xff]
        %v335 = vld [vmem:[%s1 + $0x8] sm:$0xff]
        %v336 = vld [vmem:[%s1 + $0x10] sm:$0xff]
        %v337 = vld [vmem:[%s1 + $0x18] sm:$0xff]
        %v338 = vld [vmem:[%s331] ss:$4 sm:$0x3]
        %340 = vset.pattern.permute.xlu0 0
        %341 = vperm.xlu0 %340, %v334
        %v342 = vpop.permute.xlu0 %341
        %345 = vset.pattern.permute.xlu0 0
        %346 = vperm.xlu0 %345, %v335
        %v347 = vpop.permute.xlu0 %346
        %350 = vset.pattern.permute.xlu0 0
        %351 = vperm.xlu0 %350, %v336
        %v352 = vpop.permute.xlu0 %351
        %355 = vset.pattern.permute.xlu0 0
        %356 = vperm.xlu0 %355, %v337
        %v357 = vpop.permute.xlu0 %356
        %v360 = vlaneseq
        %v361 = vshrl.u32 %v360, 7
        %v362 = vsub.s32 0, %v361
        %v363 = vrot.slane %v338, %v362
        %v364 = vlaneseq
        %v365 = vshrl.u32 %v364, 7
        %v366 = vsub.s32 1, %v365
        %v367 = vrot.slane %v338, %v366
        %v370 = vmul.f32 %v342, %v363
        %v371 = vmul.f32 %v342, %v367
        %v372 = vmul.f32 %v347, %v363
        %v373 = vmul.f32 %v347, %v367
        %v374 = vmul.f32 %v352, %v363
        %v375 = vmul.f32 %v352, %v367
        %v376 = vmul.f32 %v357, %v363
        %v377 = vmul.f32 %v357, %v367
        %s378 = scalar_lea.vmem %s331, 1
        %v379 = vld [vmem:[%s378] ss:$4 sm:$0x3]
        %380 = vset.pattern.permute.xlu0 1
        %381 = vperm.xlu0 %380, %v334
        %v382 = vpop.permute.xlu0 %381
        %384 = vset.pattern.permute.xlu0 1
        %385 = vperm.xlu0 %384, %v335
        %v386 = vpop.permute.xlu0 %385
        %388 = vset.pattern.permute.xlu0 1
        %389 = vperm.xlu0 %388, %v336
        %v390 = vpop.permute.xlu0 %389
        %392 = vset.pattern.permute.xlu0 1
        %393 = vperm.xlu0 %392, %v337
        %v394 = vpop.permute.xlu0 %393
        %v397 = vlaneseq
        %v398 = vshrl.u32 %v397, 7
        %v399 = vsub.s32 0, %v398
        %v400 = vrot.slane %v379, %v399
        %v401 = vlaneseq
        %v402 = vshrl.u32 %v401, 7
        %v403 = vsub.s32 1, %v402
        %v404 = vrot.slane %v379, %v403
        %v407 = vmul.f32 %v382, %v400
        %v408 = vmul.f32 %v382, %v404
        %v409 = vmul.f32 %v386, %v400
        %v410 = vmul.f32 %v386, %v404
        %v411 = vmul.f32 %v390, %v400
        %v412 = vmul.f32 %v390, %v404
        %v413 = vmul.f32 %v394, %v400
        %v414 = vmul.f32 %v394, %v404
        %v415 = vadd.f32 %v370, %v407
        %v416 = vadd.f32 %v371, %v408
        %v417 = vadd.f32 %v372, %v409
        %v418 = vadd.f32 %v373, %v410
        %v419 = vadd.f32 %v374, %v411
        %v420 = vadd.f32 %v375, %v412
        %v421 = vadd.f32 %v376, %v413
        %v422 = vadd.f32 %v377, %v414
        %s423 = scalar_lea.vmem %s331, 2
        %v424 = vld [vmem:[%s423] ss:$4 sm:$0x3]
        %425 = vset.pattern.permute.xlu0 2
        %426 = vperm.xlu0 %425, %v334
        %v427 = vpop.permute.xlu0 %426
        %429 = vset.pattern.permute.xlu0 2
        %430 = vperm.xlu0 %429, %v335
        %v431 = vpop.permute.xlu0 %430
        %433 = vset.pattern.permute.xlu0 2
        %434 = vperm.xlu0 %433, %v336
        %v435 = vpop.permute.xlu0 %434
        %437 = vset.pattern.permute.xlu0 2
        %438 = vperm.xlu0 %437, %v337
        %v439 = vpop.permute.xlu0 %438
        %v442 = vlaneseq
        %v443 = vshrl.u32 %v442, 7
        %v444 = vsub.s32 0, %v443
        %v445 = vrot.slane %v424, %v444
        %v446 = vlaneseq
        %v447 = vshrl.u32 %v446, 7
        %v448 = vsub.s32 1, %v447
        %v449 = vrot.slane %v424, %v448
        %v452 = vmul.f32 %v427, %v445
        %v453 = vmul.f32 %v427, %v449
        %v454 = vmul.f32 %v431, %v445
        %v455 = vmul.f32 %v431, %v449
        %v456 = vmul.f32 %v435, %v445
        %v457 = vmul.f32 %v435, %v449
        %v458 = vmul.f32 %v439, %v445
        %v459 = vmul.f32 %v439, %v449
        %v460 = vadd.f32 %v415, %v452
        %v461 = vadd.f32 %v416, %v453
        %v462 = vadd.f32 %v417, %v454
        %v463 = vadd.f32 %v418, %v455
        %v464 = vadd.f32 %v419, %v456
        %v465 = vadd.f32 %v420, %v457
        %v466 = vadd.f32 %v421, %v458
        %v467 = vadd.f32 %v422, %v459
        %v468 = vld [vmem:[%s2] sm:$0xff]
        %v469 = vld [vmem:[%s2 + $0x8] sm:$0xff]
        %v470 = vld [vmem:[%s2 + $0x10] sm:$0xff]
        %v471 = vld [vmem:[%s2 + $0x18] sm:$0xff]
        %473 = vset.pattern.permute.xlu0 0
        %474 = vperm.xlu0 %473, %v468
        %v475 = vpop.permute.xlu0 %474
        %478 = vset.pattern.permute.xlu0 0
        %479 = vperm.xlu0 %478, %v469
        %v480 = vpop.permute.xlu0 %479
        %483 = vset.pattern.permute.xlu0 0
        %484 = vperm.xlu0 %483, %v470
        %v485 = vpop.permute.xlu0 %484
        %488 = vset.pattern.permute.xlu0 0
        %489 = vperm.xlu0 %488, %v471
        %v490 = vpop.permute.xlu0 %489
        %v492 = vadd.f32 %v460, %v475
        %v493 = vadd.f32 %v461, %v475
        %v494 = vadd.f32 %v462, %v480
        %v495 = vadd.f32 %v463, %v480
        %v496 = vadd.f32 %v464, %v485
        %v497 = vadd.f32 %v465, %v485
        %v498 = vadd.f32 %v466, %v490
        %v499 = vadd.f32 %v467, %v490
        %v500 = vtanh.pop %v492
        %v501 = vtanh.pop %v493
        %v502 = vtanh.pop %v494
        %v503 = vtanh.pop %v495
        %v504 = vtanh.pop %v496
        %v505 = vtanh.pop %v497
        %v506 = vtanh.pop %v498
        %v507 = vtanh.pop %v499
        %v508 = vld [vmem:[%s3] sm:$0xff]
        %v509 = vld [vmem:[%s3 + $0x8] sm:$0xff]
        %v510 = vld [vmem:[%s3 + $0x10] sm:$0xff]
        %v511 = vld [vmem:[%s3 + $0x18] sm:$0xff]
        %v512 = vld [vmem:[%s4] sm:$0xff]
        %v513 = vld [vmem:[%s4 + $0x8] sm:$0xff]
        %v514 = vld [vmem:[%s4 + $0x10] sm:$0xff]
        %v515 = vld [vmem:[%s4 + $0x18] sm:$0xff]
        %517 = vset.pattern.permute.xlu0 0
        %518 = vperm.xlu0 %517, %v512
        %v519 = vpop.permute.xlu0 %518
        %522 = vset.pattern.permute.xlu0 0
        %523 = vperm.xlu0 %522, %v513
        %v524 = vpop.permute.xlu0 %523
        %527 = vset.pattern.permute.xlu0 0
        %528 = vperm.xlu0 %527, %v514
        %v529 = vpop.permute.xlu0 %528
        %532 = vset.pattern.permute.xlu0 0
        %533 = vperm.xlu0 %532, %v515
        %v534 = vpop.permute.xlu0 %533
        %vm536 = vcmask 261120
        %v538 = vsel %vm536, %v508, 0
        %v541 = vsel %vm536, %v509, 0
        %v544 = vsel %vm536, %v510, 0
        %v547 = vsel %vm536, %v511, 0
        %549 = vmatprep.subr.mxu0 %v501
        %550 = vmatpush1.msra.mxu0 %v500
        %551 = vmatprep.subr.mxu0 %v503
        %552 = vmatpush1.msra.mxu0 %v502
        %553 = vmatprep.subr.mxu0 %v505
        %554 = vmatpush1.msra.mxu0 %v504
        %555 = vmatprep.subr.mxu0 %v507
        %556 = vmatpush1.msra.mxu0 %v506
        %557 = vmatprep.subr.mxu0 0.0
        %558 = vmatpush1.msra.mxu0 0.0
        %559 = vmatprep.subr.mxu0 0.0
        %560 = vmatpush1.msra.mxu0 0.0
        %561 = vmatprep.subr.mxu0 0.0
        %562 = vmatpush1.msra.mxu0 0.0
        %563 = vmatprep.subr.mxu0 0.0
        %564 = vmatpush1.msra.mxu0 0.0
        %565 = vmatprep.subr.mxu0 0.0
        %566 = vmatpush1.msra.mxu0 0.0
        %567 = vmatprep.subr.mxu0 0.0
        %568 = vmatpush1.msra.mxu0 0.0
        %569 = vmatprep.subr.mxu0 0.0
        %570 = vmatpush1.msra.mxu0 0.0
        %571 = vmatprep.subr.mxu0 0.0
        %572 = vmatpush1.msra.mxu0 0.0
        %573 = vmatprep.subr.mxu0 0.0
        %574 = vmatpush1.msra.mxu0 0.0
        %575 = vmatprep.subr.mxu0 0.0
        %576 = vmatpush1.msra.mxu0 0.0
        %577 = vmatprep.subr.mxu0 0.0
        %578 = vmatpush1.msra.mxu0 0.0
        %579 = vmatprep.subr.mxu0 0.0
        %580 = vmatpush1.msra.mxu0 0.0
        %581 = vmatprep.subr.mxu0 0.0
        %582 = vmatpush1.msra.mxu0 0.0
        %583 = vmatprep.subr.mxu0 0.0
        %584 = vmatpush1.msra.mxu0 0.0
        %585 = vmatprep.subr.mxu0 0.0
        %586 = vmatpush1.msra.mxu0 0.0
        %587 = vmatprep.subr.mxu0 0.0
        %588 = vmatpush1.msra.mxu0 0.0
        %589 = vmatprep.subr.mxu0 0.0
        %590 = vmatpush1.msra.mxu0 0.0
        %591 = vmatprep.subr.mxu0 0.0
        %592 = vmatpush1.msra.mxu0 0.0
        %593 = vmatprep.subr.mxu0 0.0
        %594 = vmatpush1.msra.mxu0 0.0
        %595 = vmatprep.subr.mxu0 0.0
        %596 = vmatpush1.msra.mxu0 0.0
        %597 = vmatprep.subr.mxu0 0.0
        %598 = vmatpush1.msra.mxu0 0.0
        %599 = vmatprep.subr.mxu0 0.0
        %600 = vmatpush1.msra.mxu0 0.0
        %601 = vmatprep.subr.mxu0 0.0
        %602 = vmatpush1.msra.mxu0 0.0
        %603 = vmatprep.subr.mxu0 0.0
        %604 = vmatpush1.msra.mxu0 0.0
        %605 = vmatprep.subr.mxu0 0.0
        %606 = vmatpush1.msra.mxu0 0.0
        %607 = vmatprep.subr.mxu0 0.0
        %608 = vmatpush1.msra.mxu0 0.0
        %609 = vmatprep.subr.mxu0 0.0
        %610 = vmatpush1.msra.mxu0 0.0
        %611 = vmatprep.subr.mxu0 0.0
        %612 = vmatpush1.msra.mxu0 0.0
        %613 = vmatprep.mubr.f32.mxu0 0.0
        %614 = vmatmul.mubr.f32.gmra.mrb[0].mxu0 %v538
        %v615 = vpop.f32.mrb[0].mxu0
        %v616 = vadd.f32 %v519, %v615
        %v617 = vpop.f32.mrb[0].mxu0
        %v618 = vadd.f32 %v519, %v617
        %619 = vmatprep.mubr.f32.mxu0 0.0
        %620 = vmatmul.mubr.f32.gmra.mrb[0].mxu0 %v541
        %v621 = vpop.f32.mrb[0].mxu0
        %v622 = vadd.f32 %v524, %v621
        %v623 = vpop.f32.mrb[0].mxu0
        %v624 = vadd.f32 %v524, %v623
        %625 = vmatprep.mubr.f32.mxu0 0.0
        %626 = vmatmul.mubr.f32.gmra.mrb[0].mxu0 %v544
        %v627 = vpop.f32.mrb[0].mxu0
        %v628 = vadd.f32 %v529, %v627
        %v629 = vpop.f32.mrb[0].mxu0
        %v630 = vadd.f32 %v529, %v629
        %631 = vmatprep.mubr.f32.mxu0 0.0
        %632 = vmatmul.mubr.f32.gmra.mrb[0].mxu0 %v547
        %v633 = vpop.f32.mrb[0].mxu0
        %v634 = vadd.f32 %v534, %v633
        %v635 = vpop.f32.mrb[0].mxu0
        %v636 = vadd.f32 %v534, %v635
        %637 = vdwg.mxu0
        %v638 = vtanh.pop %v616
        %v639 = vtanh.pop %v618
        %v640 = vtanh.pop %v622
        %v641 = vtanh.pop %v624
        %v642 = vtanh.pop %v628
        %v643 = vtanh.pop %v630
        %v644 = vtanh.pop %v634
        %v645 = vtanh.pop %v636
        %v646 = vld [vmem:[%s5] sm:$0xff]
        %v647 = vld [vmem:[%s5 + $0x8] sm:$0xff]
        %v648 = vld [vmem:[%s5 + $0x10] sm:$0xff]
        %v649 = vld [vmem:[%s5 + $0x18] sm:$0xff]
        %v650 = vld [vmem:[%s6] sm:$0xff]
        %v651 = vld [vmem:[%s6 + $0x8] sm:$0xff]
        %v652 = vld [vmem:[%s6 + $0x10] sm:$0xff]
        %v653 = vld [vmem:[%s6 + $0x18] sm:$0xff]
        %655 = vset.pattern.permute.xlu0 0
        %656 = vperm.xlu0 %655, %v650
        %v657 = vpop.permute.xlu0 %656
        %660 = vset.pattern.permute.xlu0 0
        %661 = vperm.xlu0 %660, %v651
        %v662 = vpop.permute.xlu0 %661
        %665 = vset.pattern.permute.xlu0 0
        %666 = vperm.xlu0 %665, %v652
        %v667 = vpop.permute.xlu0 %666
        %670 = vset.pattern.permute.xlu0 0
        %671 = vperm.xlu0 %670, %v653
        %v672 = vpop.permute.xlu0 %671
        %v675 = vsel %vm536, %v646, 0
        %v678 = vsel %vm536, %v647, 0
        %v681 = vsel %vm536, %v648, 0
        %v684 = vsel %vm536, %v649, 0
        %686 = vmatprep.subr.mxu0 %v639
        %687 = vmatpush1.msra.mxu0 %v638
        %688 = vmatprep.subr.mxu0 %v641
        %689 = vmatpush1.msra.mxu0 %v640
        %690 = vmatprep.subr.mxu0 %v643
        %691 = vmatpush1.msra.mxu0 %v642
        %692 = vmatprep.subr.mxu0 %v645
        %693 = vmatpush1.msra.mxu0 %v644
        %694 = vmatprep.subr.mxu0 0.0
        %695 = vmatpush1.msra.mxu0 0.0
        %696 = vmatprep.subr.mxu0 0.0
        %697 = vmatpush1.msra.mxu0 0.0
        %698 = vmatprep.subr.mxu0 0.0
        %699 = vmatpush1.msra.mxu0 0.0
        %700 = vmatprep.subr.mxu0 0.0
        %701 = vmatpush1.msra.mxu0 0.0
        %702 = vmatprep.subr.mxu0 0.0
        %703 = vmatpush1.msra.mxu0 0.0
        %704 = vmatprep.subr.mxu0 0.0
        %705 = vmatpush1.msra.mxu0 0.0
        %706 = vmatprep.subr.mxu0 0.0
        %707 = vmatpush1.msra.mxu0 0.0
        %708 = vmatprep.subr.mxu0 0.0
        %709 = vmatpush1.msra.mxu0 0.0
        %710 = vmatprep.subr.mxu0 0.0
        %711 = vmatpush1.msra.mxu0 0.0
        %712 = vmatprep.subr.mxu0 0.0
        %713 = vmatpush1.msra.mxu0 0.0
        %714 = vmatprep.subr.mxu0 0.0
        %715 = vmatpush1.msra.mxu0 0.0
        %716 = vmatprep.subr.mxu0 0.0
        %717 = vmatpush1.msra.mxu0 0.0
        %718 = vmatprep.subr.mxu0 0.0
        %719 = vmatpush1.msra.mxu0 0.0
        %720 = vmatprep.subr.mxu0 0.0
        %721 = vmatpush1.msra.mxu0 0.0
        %722 = vmatprep.subr.mxu0 0.0
        %723 = vmatpush1.msra.mxu0 0.0
        %724 = vmatprep.subr.mxu0 0.0
        %725 = vmatpush1.msra.mxu0 0.0
        %726 = vmatprep.subr.mxu0 0.0
        %727 = vmatpush1.msra.mxu0 0.0
        %728 = vmatprep.subr.mxu0 0.0
        %729 = vmatpush1.msra.mxu0 0.0
        %730 = vmatprep.subr.mxu0 0.0
        %731 = vmatpush1.msra.mxu0 0.0
        %732 = vmatprep.subr.mxu0 0.0
        %733 = vmatpush1.msra.mxu0 0.0
        %734 = vmatprep.subr.mxu0 0.0
        %735 = vmatpush1.msra.mxu0 0.0
        %736 = vmatprep.subr.mxu0 0.0
        %737 = vmatpush1.msra.mxu0 0.0
        %738 = vmatprep.subr.mxu0 0.0
        %739 = vmatpush1.msra.mxu0 0.0
        %740 = vmatprep.subr.mxu0 0.0
        %741 = vmatpush1.msra.mxu0 0.0
        %742 = vmatprep.subr.mxu0 0.0
        %743 = vmatpush1.msra.mxu0 0.0
        %744 = vmatprep.subr.mxu0 0.0
        %745 = vmatpush1.msra.mxu0 0.0
        %746 = vmatprep.subr.mxu0 0.0
        %747 = vmatpush1.msra.mxu0 0.0
        %748 = vmatprep.subr.mxu0 0.0
        %749 = vmatpush1.msra.mxu0 0.0
        %750 = vmatprep.mubr.f32.mxu0 0.0
        %751 = vmatmul.mubr.f32.gmra.mrb[0].mxu0 %v675
        %v752 = vpop.f32.mrb[0].mxu0
        %v753 = vadd.f32 %v657, %v752
        %v754 = vpop.f32.mrb[0].mxu0
        %v755 = vadd.f32 %v657, %v754
        %756 = vmatprep.mubr.f32.mxu0 0.0
        %757 = vmatmul.mubr.f32.gmra.mrb[0].mxu0 %v678
        %v758 = vpop.f32.mrb[0].mxu0
        %v759 = vadd.f32 %v662, %v758
        %v760 = vpop.f32.mrb[0].mxu0
        %v761 = vadd.f32 %v662, %v760
        %762 = vmatprep.mubr.f32.mxu0 0.0
        %763 = vmatmul.mubr.f32.gmra.mrb[0].mxu0 %v681
        %v764 = vpop.f32.mrb[0].mxu0
        %v765 = vadd.f32 %v667, %v764
        %v766 = vpop.f32.mrb[0].mxu0
        %v767 = vadd.f32 %v667, %v766
        %768 = vmatprep.mubr.f32.mxu0 0.0
        %769 = vmatmul.mubr.f32.gmra.mrb[0].mxu0 %v684
        %v770 = vpop.f32.mrb[0].mxu0
        %v771 = vadd.f32 %v672, %v770
        %v772 = vpop.f32.mrb[0].mxu0
        %v773 = vadd.f32 %v672, %v772
        %774 = vdwg.mxu0
        %v775 = vtanh.pop %v753
        %v776 = vtanh.pop %v755
        %v777 = vtanh.pop %v759
        %v778 = vtanh.pop %v761
        %v779 = vtanh.pop %v765
        %v780 = vtanh.pop %v767
        %v781 = vtanh.pop %v771
        %v782 = vtanh.pop %v773
        %v783 = vld [vmem:[%s7] sm:$0x7]
        %v784 = vld [vmem:[%s8] sm:$0x7]
        %786 = vset.pattern.permute.xlu0 0
        %787 = vperm.xlu0 %786, %v784
        %v788 = vpop.permute.xlu0 %787
        %v791 = vsel %vm536, %v783, 0
        %793 = vmatprep.subr.mxu0 %v776
        %794 = vmatpush1.msra.mxu0 %v775
        %795 = vmatprep.subr.mxu0 %v778
        %796 = vmatpush1.msra.mxu0 %v777
        %797 = vmatprep.subr.mxu0 %v780
        %798 = vmatpush1.msra.mxu0 %v779
        %799 = vmatprep.subr.mxu0 %v782
        %800 = vmatpush1.msra.mxu0 %v781
        %801 = vmatprep.subr.mxu0 0.0
        %802 = vmatpush1.msra.mxu0 0.0
        %803 = vmatprep.subr.mxu0 0.0
        %804 = vmatpush1.msra.mxu0 0.0
        %805 = vmatprep.subr.mxu0 0.0
        %806 = vmatpush1.msra.mxu0 0.0
        %807 = vmatprep.subr.mxu0 0.0
        %808 = vmatpush1.msra.mxu0 0.0
        %809 = vmatprep.subr.mxu0 0.0
        %810 = vmatpush1.msra.mxu0 0.0
        %811 = vmatprep.subr.mxu0 0.0
        %812 = vmatpush1.msra.mxu0 0.0
        %813 = vmatprep.subr.mxu0 0.0
        %814 = vmatpush1.msra.mxu0 0.0
        %815 = vmatprep.subr.mxu0 0.0
        %816 = vmatpush1.msra.mxu0 0.0
        %817 = vmatprep.subr.mxu0 0.0
        %818 = vmatpush1.msra.mxu0 0.0
        %819 = vmatprep.subr.mxu0 0.0
        %820 = vmatpush1.msra.mxu0 0.0
        %821 = vmatprep.subr.mxu0 0.0
        %822 = vmatpush1.msra.mxu0 0.0
        %823 = vmatprep.subr.mxu0 0.0
        %824 = vmatpush1.msra.mxu0 0.0
        %825 = vmatprep.subr.mxu0 0.0
        %826 = vmatpush1.msra.mxu0 0.0
        %827 = vmatprep.subr.mxu0 0.0
        %828 = vmatpush1.msra.mxu0 0.0
        %829 = vmatprep.subr.mxu0 0.0
        %830 = vmatpush1.msra.mxu0 0.0
        %831 = vmatprep.subr.mxu0 0.0
        %832 = vmatpush1.msra.mxu0 0.0
        %833 = vmatprep.subr.mxu0 0.0
        %834 = vmatpush1.msra.mxu0 0.0
        %835 = vmatprep.subr.mxu0 0.0
        %836 = vmatpush1.msra.mxu0 0.0
        %837 = vmatprep.subr.mxu0 0.0
        %838 = vmatpush1.msra.mxu0 0.0
        %839 = vmatprep.subr.mxu0 0.0
        %840 = vmatpush1.msra.mxu0 0.0
        %841 = vmatprep.subr.mxu0 0.0
        %842 = vmatpush1.msra.mxu0 0.0
        %843 = vmatprep.subr.mxu0 0.0
        %844 = vmatpush1.msra.mxu0 0.0
        %845 = vmatprep.subr.mxu0 0.0
        %846 = vmatpush1.msra.mxu0 0.0
        %847 = vmatprep.subr.mxu0 0.0
        %848 = vmatpush1.msra.mxu0 0.0
        %849 = vmatprep.subr.mxu0 0.0
        %850 = vmatpush1.msra.mxu0 0.0
        %851 = vmatprep.subr.mxu0 0.0
        %852 = vmatpush1.msra.mxu0 0.0
        %853 = vmatprep.subr.mxu0 0.0
        %854 = vmatpush1.msra.mxu0 0.0
        %855 = vmatprep.subr.mxu0 0.0
        %856 = vmatpush1.msra.mxu0 0.0
        %857 = vmatprep.mubr.f32.mxu0 0.0
        %858 = vmatmul.mubr.f32.gmra.mrb[0].mxu0 %v791
        %v859 = vpop.f32.mrb[0].mxu0
        %v860 = vadd.f32 %v788, %v859
        %v861 = vpop.f32.mrb[0].mxu0
        %v862 = vadd.f32 %v788, %v861
        %863 = vdwg.mxu0
        %v866 = vcombine.low %v860, %v862
        %868 = vst [vmem:[%s326] sm:$0x77] %v866
        %s869 = sand.u32 %s225, 1
        %s870 = scalar_lea.sflag [#allocation3], %s869
        %s871 = sand.u32 %s225, 1
        %s872 = smul.addr %s871, 8
        %s873 = scalar_lea.vmem [#allocation2], %s872
        // Predicated region
        $region57: #{tpu_custom_call.1} parent=55 // pred_check
          %p874 = pneg %p235
        $region58: #{tpu_custom_call.1} parent=55 // pred_check_branch
          %876 = sbr.rel (%p874) target = $region60
        $region59: #{tpu_custom_call.1} parent=55 // pred_region
          %s877 = smul.u32 2, %s23
          %s879 = ssub.s32 128, 128
          %880 = vsyncadd %s870, %s879
          %s881 = smul.addr %s877, 64
          %s882 = scalar_lea.hbm %s9, %s881
          %s884 = sshll.u32 %s873, 4
          %s885 = int_to_ptr.vmem [resolvable:$true] %s884
          %887 = dma.vmem_to_hbm [thread:$0]  %s885, 128, %s882, %s870
        $region60: #{tpu_custom_call.1} parent=55 // pred_fallthru
          _
      $region56: #{tpu_custom_call.1} parent=5 // pred_fallthru
        _
      %p888 = scmp.le.s32.totalorder 2, %s18
      // Predicated region
      $region61: #{tpu_custom_call.1} parent=5 // pred_check
        %p889 = pneg %p888
      $region62: #{tpu_custom_call.1} parent=5 // pred_check_branch
        %891 = sbr.rel (%p889) target = $region64
      $region63: #{tpu_custom_call.1} parent=5 // pred_region
        %s892 = ssub.s32 %s18, 2
        // Predicated region
        $region65: #{tpu_custom_call.1} parent=63 // pred_check
          %p893 = pneg %p241
        $region66: #{tpu_custom_call.1} parent=63 // pred_check_branch
          %895 = sbr.rel (%p893) target = $region68
        $region67: #{tpu_custom_call.1} parent=63 // pred_region
          %s896 = sand.u32 %s226, 1
          %s897 = scalar_lea.sflag [#allocation3], %s896
          %s898 = sand.u32 %s226, 1
          %s899 = smul.addr %s898, 8
          %s900 = scalar_lea.vmem [#allocation2], %s899
          %901 = dma.done %s897, 128
        $region68: #{tpu_custom_call.1} parent=63 // pred_fallthru
          _
      $region64: #{tpu_custom_call.1} parent=5 // pred_fallthru
        _
    $region6: #{tpu_custom_call.1} parent=1 // loop_footer
      %s22 = sadd.s32 1, %s18
    $region7: #{tpu_custom_call.1} parent=1 // loop_footer_branch
      %17 = sbr.rel target = $region3
    $region8: #{tpu_custom_call.1} parent=1 // loop_exit
      _
    %902 = vsyncpa [#allocation3], 1
    %s903 = scalar_lea.sflag [#allocation3], 1
    %904 = vsyncpa %s903, 1

</llo_original>
